<compile_context>
chip_gen: v7x
topology: tpu7x:2x2x1
jax: 0.10.0
libtpu: 0.0.40
codegen_flags: <defaults>
</compile_context>

<pallas_src>
import functools

import jax
import jax.numpy as jnp
from jax import lax
from jax.experimental import pallas as pl
from jax.experimental.pallas import tpu as pltpu


def _bottleneck_kernel(x_ref, xt_ref, xb_ref, lmask_ref, rmask_ref,
                       w1_ref, b1_ref, w2_ref, b2_ref, w3_ref, b3_ref,
                       o_ref, *, TH, W, Cin, width, Cout):
    rows = TH * W
    f32 = jnp.float32
    bf16 = jnp.bfloat16

    h_blk = pl.program_id(1)
    is_first = h_blk == 0
    is_last = h_blk == pl.num_programs(1) - 1

    # ---- conv1 (1x1) + folded-BN bias + ReLU ----------------------------------
    # Main band as one (rows, Cin) matmul; the two halo rows as one tiny
    # (2W, Cin) matmul (no full-band f32 concat, no 4D reshape).
    xm = x_ref[0].astype(bf16)                                        # (rows, Cin)
    xh = jnp.concatenate([xt_ref[0], xb_ref[0]], axis=0).astype(bf16)  # (2W, Cin)

    a1_main = jnp.maximum(
        jnp.dot(xm, w1_ref[...], preferred_element_type=f32) + b1_ref[...], 0.0)
    a1_halo = jnp.maximum(
        jnp.dot(xh, w1_ref[...], preferred_element_type=f32) + b1_ref[...], 0.0)

    # Halo rows that fall outside the image must be *zero* padding for the 3x3
    # conv (not relu(b1)); only 2*W rows are masked (cheap, edge-aware).
    a1_top = jnp.where(is_first, 0.0, a1_halo[:W]).astype(bf16)        # (W, width)
    a1_bot = jnp.where(is_last, 0.0, a1_halo[W:]).astype(bf16)         # (W, width)
    a1_mb = a1_main.astype(bf16)                                       # single bf16 cast

    # Padded band, flattened row-major: ((TH+2)*W, width) bf16.
    a1_all = jnp.concatenate([a1_top, a1_mb, a1_bot], axis=0)

    # ---- conv2 (3x3, pad 1) as one fused MXU matmul ---------------------------
    # K = the three dy-shifted copies of a1 (3*width); N = the three dx taps
    # (3*width).  w2_ref is pre-packed (3*width, 3*width) with BN scale folded.
    big = jnp.concatenate(
        [a1_all[0:rows], a1_all[W:W + rows], a1_all[2 * W:2 * W + rows]],
        axis=-1)                                                       # (rows, 3w) bf16
    m = jnp.dot(big, w2_ref[...], preferred_element_type=f32)          # (rows, 3w) f32
    m_l = m[:, :width]
    m_c = m[:, width:2 * width]
    m_r = m[:, 2 * width:]

    # dx = -1 / +1 contributions come from the flattened-row neighbours; the
    # wrap-around rows are exactly the image W-borders, zeroed via precomputed
    # (rows, 1) masks (no per-step iota / modulo).
    from_l = pltpu.roll(m_l, 1, axis=0) * lmask_ref[...]               # reads (h, w-1)
    from_r = pltpu.roll(m_r, rows - 1, axis=0) * rmask_ref[...]        # reads (h, w+1)
    t2 = jnp.maximum(m_c + from_l + from_r + b2_ref[...], 0.0)

    # ---- conv3 (1x1) + folded-BN bias, residual add + ReLU (f32 epilogue) -----
    t3 = jnp.dot(t2.astype(bf16), w3_ref[...], preferred_element_type=f32) + b3_ref[...]
    y = jnp.maximum(t3 + x_ref[0].astype(f32), 0.0)
    o_ref[...] = y.reshape(1, rows, Cout).astype(o_ref.dtype)


# ---------------------------------------------------------------------------
# Tiling / VMEM budgeting
# ---------------------------------------------------------------------------
def _physical_vmem_bytes():
    try:
        info = pltpu.get_tpu_info()
        cap = getattr(info, "vmem_capacity_bytes", None)
        if cap:
            return int(cap)
    except Exception:
        pass
    return 64 * 1024 * 1024  # conservative fallback (v7x per-TensorCore)


def _weight_bytes(Cin, width, Cout):
    return 2 * (Cin * width + 9 * width * width + width * Cout) + 4 * (2 * width + Cout)


def _act_step_bytes(TH, W, Cin, width, Cout, xbytes):
    """Per-grid-step activation working set (double-buffered I/O included)."""
    rows = TH * W
    io = xbytes * (rows * Cin + 2 * W * Cin + rows * Cout)
    io *= 2                                           # pipeline double-buffering
    a1 = 2 * (rows + 2 * W) * width                   # bf16
    big = 2 * rows * 3 * width                        # bf16 fused conv2 input
    m = 4 * rows * 3 * width                          # f32 conv2 output
    edges = 2 * 4 * rows * width                      # from_l / from_r
    t2 = (4 + 2) * rows * width
    t3 = 2 * 4 * rows * Cout
    return io + a1 + big + m + edges + t2 + t3


def _pick_block_rows(N, H, W, Cin, width, Cout, xbytes):
    """Largest divisor of H whose per-step working set fits the VMEM budget."""
    cap = _physical_vmem_bytes()
    budget = int(0.4 * cap) - 2 * _weight_bytes(Cin, width, Cout)
    fits = [d for d in range(1, H + 1)
            if H % d == 0 and _act_step_bytes(d, W, Cin, width, Cout, xbytes) <= budget]
    if not fits:
        return 1
    if N % 2 == 1:
        # Megacore sharding (v7x): prefer an even number of row bands.
        even = [d for d in fits if (H // d) % 2 == 0]
        if even:
            return max(even)
    return max(fits)


def _vmem_limit_bytes(TH, W, Cin, width, Cout, xbytes):
    cap = _physical_vmem_bytes()
    est = (_act_step_bytes(TH, W, Cin, width, Cout, xbytes)
           + 2 * _weight_bytes(Cin, width, Cout))
    # Leave headroom for Mosaic internal scratch; never ask for more than ~75%
    # of physical VMEM (~48 MiB on v7x, ~96 MiB on v5e/v6e).
    return int(min(max(2 * est, 32 * 1024 * 1024), int(0.75 * cap)))


# ---------------------------------------------------------------------------
# Wrapper
# ---------------------------------------------------------------------------
def bottleneck_pallas(x_nhwc, params, block_rows=None):
    """x_nhwc: (N, H, W, Cin) float32 or bfloat16.  params: see make_params."""
    N, H, W, Cin = x_nhwc.shape
    width = params["w1"].shape[1]
    Cout = params["w3"].shape[1]
    assert Cin == Cout, "downsample=None requires inplanes == planes * expansion"
    assert W % 8 == 0, "flattened layout needs W % 8 == 0 (see TODO for 7x7 stages)"

    xbytes = jnp.dtype(x_nhwc.dtype).itemsize
    TH = (_pick_block_rows(N, H, W, Cin, width, Cout, xbytes)
          if block_rows is None else block_rows)
    if H % TH != 0:
        raise ValueError(f"block_rows={TH} must divide H={H}")
    rows = TH * W
    grid = (N, H // TH)

    # Flattened spatial layout (free reshape for contiguous NHWC).
    x_flat = x_nhwc.reshape(N, H * W, Cin)

    # Precomputed W-border masks for the dx shifts (same for every band).
    col = jnp.arange(rows, dtype=jnp.int32) % W
    lmask = (col != 0).astype(jnp.float32).reshape(rows, 1)
    rmask = (col != W - 1).astype(jnp.float32).reshape(rows, 1)

    kernel = functools.partial(_bottleneck_kernel,
                               TH=TH, W=W, Cin=Cin, width=width, Cout=Cout)

    in_specs = [
        # main row band + its clamped halo rows (zeroed in-kernel at edges)
        pl.BlockSpec((1, rows, Cin), lambda n, h: (n, h, 0)),
        pl.BlockSpec((1, W, Cin), lambda n, h: (n, jnp.maximum(h * TH - 1, 0), 0)),
        pl.BlockSpec((1, W, Cin), lambda n, h: (n, jnp.minimum(h * TH + TH, H - 1), 0)),
        # border masks: constant index maps -> resident in VMEM
        pl.BlockSpec((rows, 1), lambda n, h: (0, 0)),
        pl.BlockSpec((rows, 1), lambda n, h: (0, 0)),
        # weights / biases: constant index maps -> resident in VMEM
        pl.BlockSpec((Cin, width), lambda n, h: (0, 0)),
        pl.BlockSpec((1, width), lambda n, h: (0, 0)),
        pl.BlockSpec((3 * width, 3 * width), lambda n, h: (0, 0)),
        pl.BlockSpec((1, width), lambda n, h: (0, 0)),
        pl.BlockSpec((width, Cout), lambda n, h: (0, 0)),
        pl.BlockSpec((1, Cout), lambda n, h: (0, 0)),
    ]
    out_specs = pl.BlockSpec((1, rows, Cout), lambda n, h: (n, h, 0))

    flops = 2 * N * H * W * (Cin * width + 9 * width * width + width * Cout)
    bytes_accessed = (xbytes * N * H * W * (Cin + Cout)
                      + _weight_bytes(Cin, width, Cout))
    cost = pl.CostEstimate(flops=flops, transcendentals=0,
                           bytes_accessed=bytes_accessed)

    out_flat = pl.pallas_call(
        kernel,
        out_shape=jax.ShapeDtypeStruct((N, H * W, Cout), x_nhwc.dtype),
        grid=grid,
        in_specs=in_specs,
        out_specs=out_specs,
        compiler_params=pltpu.CompilerParams(
            dimension_semantics=("parallel", "parallel"),
            vmem_limit_bytes=_vmem_limit_bytes(TH, W, Cin, width, Cout, xbytes)),
        cost_estimate=cost,
    )(x_flat, x_flat, x_flat, lmask, rmask,
      params["w1"], params["b1"], params["w2"], params["b2"],
      params["w3"], params["b3"])
    return out_flat.reshape(N, H, W, Cout)


# ---------------------------------------------------------------------------
# Parameter construction (deterministic, synthetic) + pure-JAX reference
# ---------------------------------------------------------------------------
def make_params(key, inplanes, planes, base_width=64, groups=1):
    expansion = 4
    width = int(planes * (base_width / 64.0)) * groups
    cout = planes * expansion
    eps = 1e-5
    keys = jax.random.split(key, 15)

    def bn_fold(k0, k1, k2, k3, c):
        gamma = jax.random.normal(k0, (c,), jnp.float32) * 0.1 + 1.0
        beta = jax.random.normal(k1, (c,), jnp.float32) * 0.1
        mean = jax.random.normal(k2, (c,), jnp.float32) * 0.1
        var = jax.random.uniform(k3, (c,), jnp.float32, minval=0.5, maxval=1.5)
        scale = gamma / jnp.sqrt(var + eps)
        bias = beta - mean * scale
        return scale, bias

    # PyTorch conv weight layouts: (out, in, kh, kw)
    w1_t = jax.random.normal(keys[0], (width, inplanes, 1, 1), jnp.float32) * 0.1
    w2_t = jax.random.normal(keys[1], (width, width, 3, 3), jnp.float32) * 0.1
    w3_t = jax.random.normal(keys[2], (cout, width, 1, 1), jnp.float32) * 0.1

    s1, b1 = bn_fold(keys[3], keys[4], keys[5], keys[6], width)
    s2, b2 = bn_fold(keys[7], keys[8], keys[9], keys[10], width)
    s3, b3 = bn_fold(keys[11], keys[12], keys[13], keys[14], cout)

    # Kernel layouts: BN scale folded into the conv weights; bf16 MXU operands.
    w1 = (w1_t[:, :, 0, 0].T * s1[None, :]).astype(jnp.bfloat16)        # (Cin, width)
    # conv2 packed as a (3*width, 3*width) block matrix: K-blocks = dy taps,
    # N-blocks = dx taps (so big @ w2 gives [m_left | m_center | m_right]).
    taps = [(w2_t[:, :, k // 3, k % 3].T * s2[None, :]) for k in range(9)]
    w2 = jnp.concatenate(
        [jnp.concatenate([taps[dy * 3 + dx] for dx in range(3)], axis=1)
         for dy in range(3)], axis=0).astype(jnp.bfloat16)               # (3w, 3w)
    w3 = (w3_t[:, :, 0, 0].T * s3[None, :]).astype(jnp.bfloat16)        # (width, Cout)

    params = {"w1": w1, "b1": b1.reshape(1, width),
              "w2": w2, "b2": b2.reshape(1, width),
              "w3": w3, "b3": b3.reshape(1, cout)}

    ref = {"w1_hwio": jnp.transpose(w1_t, (2, 3, 1, 0)),
           "w2_hwio": jnp.transpose(w2_t, (2, 3, 1, 0)),
           "w3_hwio": jnp.transpose(w3_t, (2, 3, 1, 0)),
           "s1": s1, "b1": b1, "s2": s2, "b2": b2, "s3": s3, "b3": b3}
    return params, ref


def bottleneck_reference(x_nhwc, ref):
    """Pure-JAX f32 reference (NHWC convs + separate BN scale/bias)."""
    dn = lax.conv_dimension_numbers(x_nhwc.shape, ref["w1_hwio"].shape,
                                    ("NHWC", "HWIO", "NHWC"))

    def conv(x, w, padding):
        return lax.conv_general_dilated(x, w, (1, 1), padding, dimension_numbers=dn)

    o = conv(x_nhwc, ref["w1_hwio"], "VALID")
    o = jnp.maximum(o * ref["s1"] + ref["b1"], 0.0)
    o = conv(o, ref["w2_hwio"], [(1, 1), (1, 1)])
    o = jnp.maximum(o * ref["s2"] + ref["b2"], 0.0)
    o = conv(o, ref["w3_hwio"], "VALID")
    o = o * ref["s3"] + ref["b3"]
    return jnp.maximum(o + x_nhwc, 0.0)


if __name__ == "__main__":
    # inplanes = planes * expansion so the identity path is valid with
    # downsample=None and stride=1 (the module defaults).
    N, H, W = 2, 8, 8
    planes = 8
    inplanes = planes * 4          # 32
    key = jax.random.PRNGKey(0)
    kx, kp = jax.random.split(key)

    # PyTorch-style NCHW input, transposed to NHWC for the kernel.
    x_nchw = jax.random.normal(kx, (N, inplanes, H, W), jnp.float32)
    x_nhwc = jnp.transpose(x_nchw, (0, 2, 3, 1))

    params, ref_w = make_params(kp, inplanes, planes)
    expected = bottleneck_reference(x_nhwc, ref_w)

    # Exercise multi-band (interior + edge halo) and the auto-sized band path.
    for br in (2, 4, None):
        out_nhwc = jax.block_until_ready(bottleneck_pallas(x_nhwc, params, block_rows=br))
        out_nchw = jnp.transpose(out_nhwc, (0, 3, 1, 2))   # back to PyTorch layout
        assert out_nchw.shape == x_nchw.shape
        max_err = float(jnp.max(jnp.abs(out_nhwc - expected)))
        assert jnp.allclose(out_nhwc, expected, rtol=5e-2, atol=5e-2), (
            f"mismatch vs reference (block_rows={br}, max_err={max_err})")

    print("KERNEL_OK")
</pallas_src>

<mosaic_0001>
module attributes {stable_mosaic.version = 11 : i64} {
  func.func @_bottleneck_kernel(%arg0: i32, %arg1: i32, %arg2: memref<1x16x32xf32, #tpu.memory_space<vmem>>, %arg3: memref<1x8x32xf32, #tpu.memory_space<vmem>>, %arg4: memref<1x8x32xf32, #tpu.memory_space<vmem>>, %arg5: memref<16x1xf32, #tpu.memory_space<vmem>>, %arg6: memref<16x1xf32, #tpu.memory_space<vmem>>, %arg7: memref<32x8xbf16, #tpu.memory_space<vmem>>, %arg8: memref<1x8xf32, #tpu.memory_space<vmem>>, %arg9: memref<24x24xbf16, #tpu.memory_space<vmem>>, %arg10: memref<1x8xf32, #tpu.memory_space<vmem>>, %arg11: memref<8x32xbf16, #tpu.memory_space<vmem>>, %arg12: memref<1x32xf32, #tpu.memory_space<vmem>>, %arg13: memref<1x16x32xf32, #tpu.memory_space<vmem>>) attributes {dimension_semantics = [#tpu.dimension_semantics<parallel>, #tpu.dimension_semantics<parallel>], iteration_bounds = array<i64: 2, 4>, scalar_prefetch = 0 : i64, scratch_operands = 0 : i64, tpu.core_type = #tpu.core_type<tc>, window_params = [{transform_indices = @transform_0, window_bounds = array<i64: 1, 16, 32>}, {transform_indices = @transform_1, window_bounds = array<i64: 1, 8, 32>}, {transform_indices = @transform_2, window_bounds = array<i64: 1, 8, 32>}, {pipeline_mode = #tpu.pipeline_mode<synchronous>, transform_indices = @transform_3, window_bounds = array<i64: 16, 1>}, {pipeline_mode = #tpu.pipeline_mode<synchronous>, transform_indices = @transform_4, window_bounds = array<i64: 16, 1>}, {pipeline_mode = #tpu.pipeline_mode<synchronous>, transform_indices = @transform_5, window_bounds = array<i64: 32, 8>}, {pipeline_mode = #tpu.pipeline_mode<synchronous>, transform_indices = @transform_6, window_bounds = array<i64: 1, 8>}, {pipeline_mode = #tpu.pipeline_mode<synchronous>, transform_indices = @transform_7, window_bounds = array<i64: 24, 24>}, {pipeline_mode = #tpu.pipeline_mode<synchronous>, transform_indices = @transform_8, window_bounds = array<i64: 1, 8>}, {pipeline_mode = #tpu.pipeline_mode<synchronous>, transform_indices = @transform_9, window_bounds = array<i64: 8, 32>}, {pipeline_mode = #tpu.pipeline_mode<synchronous>, transform_indices = @transform_10, window_bounds = array<i64: 1, 32>}, {transform_indices = @transform_11, window_bounds = array<i64: 1, 16, 32>}]} {
    %c0_i32 = arith.constant 0 : i32
    %0 = arith.cmpi eq, %arg1, %c0_i32 : i32
    %c3_i32 = arith.constant 3 : i32
    %1 = arith.cmpi eq, %arg1, %c3_i32 : i32
    %c0 = arith.constant 0 : index
    %c0_0 = arith.constant 0 : index
    %c0_1 = arith.constant 0 : index
    %2 = vector.load %arg2[%c0, %c0_0, %c0_1] : memref<1x16x32xf32, #tpu.memory_space<vmem>>, vector<1x16x32xf32>
    %3 = vector.shape_cast %2 : vector<1x16x32xf32> to vector<16x32xf32>
    %4 = arith.truncf %3 : vector<16x32xf32> to vector<16x32xbf16>
    %c0_2 = arith.constant 0 : index
    %c0_3 = arith.constant 0 : index
    %c0_4 = arith.constant 0 : index
    %5 = vector.load %arg3[%c0_2, %c0_3, %c0_4] : memref<1x8x32xf32, #tpu.memory_space<vmem>>, vector<1x8x32xf32>
    %6 = vector.shape_cast %5 : vector<1x8x32xf32> to vector<8x32xf32>
    %c0_5 = arith.constant 0 : index
    %c0_6 = arith.constant 0 : index
    %c0_7 = arith.constant 0 : index
    %7 = vector.load %arg4[%c0_5, %c0_6, %c0_7] : memref<1x8x32xf32, #tpu.memory_space<vmem>>, vector<1x8x32xf32>
    %8 = vector.shape_cast %7 : vector<1x8x32xf32> to vector<8x32xf32>
    %9 = tpu.concatenate %6, %8 in 0 : vector<8x32xf32>, vector<8x32xf32> -> vector<16x32xf32>
    %10 = arith.truncf %9 : vector<16x32xf32> to vector<16x32xbf16>
    %c0_8 = arith.constant 0 : index
    %c0_9 = arith.constant 0 : index
    %11 = vector.load %arg7[%c0_8, %c0_9] : memref<32x8xbf16, #tpu.memory_space<vmem>>, vector<32x8xbf16>
    %cst = arith.constant dense<0.000000e+00> : vector<16x8xf32>
    %12 = tpu.matmul %4, %11, %cst {dimension_numbers = #tpu.dot_dimension_numbers<[1], [0], [0], [1], [0, 0, 1, 1], [], []>} : vector<16x32xbf16>, vector<32x8xbf16>, vector<16x8xf32> -> vector<16x8xf32>
    %c0_10 = arith.constant 0 : index
    %c0_11 = arith.constant 0 : index
    %13 = vector.load %arg8[%c0_10, %c0_11] : memref<1x8xf32, #tpu.memory_space<vmem>>, vector<1x8xf32>
    %14 = vector.broadcast %13 : vector<1x8xf32> to vector<16x8xf32>
    %15 = arith.addf %12, %14 : vector<16x8xf32>
    %cst_12 = arith.constant 0.000000e+00 : f32
    %16 = vector.broadcast %cst_12 : f32 to vector<16x8xf32>
    %17 = arith.maximumf %15, %16 : vector<16x8xf32>
    %c0_13 = arith.constant 0 : index
    %c0_14 = arith.constant 0 : index
    %18 = vector.load %arg7[%c0_13, %c0_14] : memref<32x8xbf16, #tpu.memory_space<vmem>>, vector<32x8xbf16>
    %cst_15 = arith.constant dense<0.000000e+00> : vector<16x8xf32>
    %19 = tpu.matmul %10, %18, %cst_15 {dimension_numbers = #tpu.dot_dimension_numbers<[1], [0], [0], [1], [0, 0, 1, 1], [], []>} : vector<16x32xbf16>, vector<32x8xbf16>, vector<16x8xf32> -> vector<16x8xf32>
    %c0_16 = arith.constant 0 : index
    %c0_17 = arith.constant 0 : index
    %20 = vector.load %arg8[%c0_16, %c0_17] : memref<1x8xf32, #tpu.memory_space<vmem>>, vector<1x8xf32>
    %21 = vector.broadcast %20 : vector<1x8xf32> to vector<16x8xf32>
    %22 = arith.addf %19, %21 : vector<16x8xf32>
    %cst_18 = arith.constant 0.000000e+00 : f32
    %23 = vector.broadcast %cst_18 : f32 to vector<16x8xf32>
    %24 = arith.maximumf %22, %23 : vector<16x8xf32>
    %25 = vector.extract_strided_slice %24 {offsets = [0, 0], sizes = [8, 8], strides = [1, 1]} : vector<16x8xf32> to vector<8x8xf32>
    %cst_19 = arith.constant 0.000000e+00 : f32
    %26 = vector.broadcast %cst_19 : f32 to vector<8x8xf32>
    %27 = arith.select %0, %26, %25 : vector<8x8xf32>
    %28 = arith.truncf %27 : vector<8x8xf32> to vector<8x8xbf16>
    %29 = vector.extract_strided_slice %24 {offsets = [8, 0], sizes = [8, 8], strides = [1, 1]} : vector<16x8xf32> to vector<8x8xf32>
    %cst_20 = arith.constant 0.000000e+00 : f32
    %30 = vector.broadcast %cst_20 : f32 to vector<8x8xf32>
    %31 = arith.select %1, %30, %29 : vector<8x8xf32>
    %32 = arith.truncf %31 : vector<8x8xf32> to vector<8x8xbf16>
    %33 = arith.truncf %17 : vector<16x8xf32> to vector<16x8xbf16>
    %34 = tpu.concatenate %28, %33, %32 in 0 : vector<8x8xbf16>, vector<16x8xbf16>, vector<8x8xbf16> -> vector<32x8xbf16>
    %35 = vector.extract_strided_slice %34 {offsets = [0, 0], sizes = [16, 8], strides = [1, 1]} : vector<32x8xbf16> to vector<16x8xbf16>
    %36 = vector.extract_strided_slice %34 {offsets = [8, 0], sizes = [16, 8], strides = [1, 1]} : vector<32x8xbf16> to vector<16x8xbf16>
    %37 = vector.extract_strided_slice %34 {offsets = [16, 0], sizes = [16, 8], strides = [1, 1]} : vector<32x8xbf16> to vector<16x8xbf16>
    %38 = tpu.concatenate %35, %36, %37 in 1 : vector<16x8xbf16>, vector<16x8xbf16>, vector<16x8xbf16> -> vector<16x24xbf16>
    %c0_21 = arith.constant 0 : index
    %c0_22 = arith.constant 0 : index
    %39 = vector.load %arg9[%c0_21, %c0_22] : memref<24x24xbf16, #tpu.memory_space<vmem>>, vector<24x24xbf16>
    %cst_23 = arith.constant dense<0.000000e+00> : vector<16x24xf32>
    %40 = tpu.matmul %38, %39, %cst_23 {dimension_numbers = #tpu.dot_dimension_numbers<[1], [0], [0], [1], [0, 0, 1, 1], [], []>} : vector<16x24xbf16>, vector<24x24xbf16>, vector<16x24xf32> -> vector<16x24xf32>
    %41 = vector.extract_strided_slice %40 {offsets = [0, 0], sizes = [16, 8], strides = [1, 1]} : vector<16x24xf32> to vector<16x8xf32>
    %42 = vector.extract_strided_slice %40 {offsets = [0, 8], sizes = [16, 8], strides = [1, 1]} : vector<16x24xf32> to vector<16x8xf32>
    %43 = vector.extract_strided_slice %40 {offsets = [0, 16], sizes = [16, 8], strides = [1, 1]} : vector<16x24xf32> to vector<16x8xf32>
    %c1_i32 = arith.constant 1 : i32
    %44 = tpu.dynamic_rotate %41 by %c1_i32 dim 0 : vector<16x8xf32>, i32 -> vector<16x8xf32>
    %c0_24 = arith.constant 0 : index
    %c0_25 = arith.constant 0 : index
    %45 = vector.load %arg5[%c0_24, %c0_25] : memref<16x1xf32, #tpu.memory_space<vmem>>, vector<16x1xf32>
    %46 = vector.broadcast %45 : vector<16x1xf32> to vector<16x8xf32>
    %47 = arith.mulf %44, %46 : vector<16x8xf32>
    %c15_i32 = arith.constant 15 : i32
    %48 = tpu.dynamic_rotate %43 by %c15_i32 dim 0 : vector<16x8xf32>, i32 -> vector<16x8xf32>
    %c0_26 = arith.constant 0 : index
    %c0_27 = arith.constant 0 : index
    %49 = vector.load %arg6[%c0_26, %c0_27] : memref<16x1xf32, #tpu.memory_space<vmem>>, vector<16x1xf32>
    %50 = vector.broadcast %49 : vector<16x1xf32> to vector<16x8xf32>
    %51 = arith.mulf %48, %50 : vector<16x8xf32>
    %52 = arith.addf %42, %47 : vector<16x8xf32>
    %53 = arith.addf %52, %51 : vector<16x8xf32>
    %c0_28 = arith.constant 0 : index
    %c0_29 = arith.constant 0 : index
    %54 = vector.load %arg10[%c0_28, %c0_29] : memref<1x8xf32, #tpu.memory_space<vmem>>, vector<1x8xf32>
    %55 = vector.broadcast %54 : vector<1x8xf32> to vector<16x8xf32>
    %56 = arith.addf %53, %55 : vector<16x8xf32>
    %cst_30 = arith.constant 0.000000e+00 : f32
    %57 = vector.broadcast %cst_30 : f32 to vector<16x8xf32>
    %58 = arith.maximumf %56, %57 : vector<16x8xf32>
    %59 = arith.truncf %58 : vector<16x8xf32> to vector<16x8xbf16>
    %c0_31 = arith.constant 0 : index
    %c0_32 = arith.constant 0 : index
    %60 = vector.load %arg11[%c0_31, %c0_32] : memref<8x32xbf16, #tpu.memory_space<vmem>>, vector<8x32xbf16>
    %cst_33 = arith.constant dense<0.000000e+00> : vector<16x32xf32>
    %61 = tpu.matmul %59, %60, %cst_33 {dimension_numbers = #tpu.dot_dimension_numbers<[1], [0], [0], [1], [0, 0, 1, 1], [], []>} : vector<16x8xbf16>, vector<8x32xbf16>, vector<16x32xf32> -> vector<16x32xf32>
    %c0_34 = arith.constant 0 : index
    %c0_35 = arith.constant 0 : index
    %62 = vector.load %arg12[%c0_34, %c0_35] : memref<1x32xf32, #tpu.memory_space<vmem>>, vector<1x32xf32>
    %63 = vector.broadcast %62 : vector<1x32xf32> to vector<16x32xf32>
    %64 = arith.addf %61, %63 : vector<16x32xf32>
    %c0_36 = arith.constant 0 : index
    %c0_37 = arith.constant 0 : index
    %c0_38 = arith.constant 0 : index
    %65 = vector.load %arg2[%c0_36, %c0_37, %c0_38] : memref<1x16x32xf32, #tpu.memory_space<vmem>>, vector<1x16x32xf32>
    %66 = vector.shape_cast %65 : vector<1x16x32xf32> to vector<16x32xf32>
    %67 = arith.addf %64, %66 : vector<16x32xf32>
    %cst_39 = arith.constant 0.000000e+00 : f32
    %68 = vector.broadcast %cst_39 : f32 to vector<16x32xf32>
    %69 = arith.maximumf %67, %68 : vector<16x32xf32>
    %70 = vector.shape_cast %69 : vector<16x32xf32> to vector<1x16x32xf32>
    %c0_40 = arith.constant 0 : index
    %c0_41 = arith.constant 0 : index
    %c0_42 = arith.constant 0 : index
    %71 = vector.load %arg13[%c0_40, %c0_41, %c0_42] : memref<1x16x32xf32, #tpu.memory_space<vmem>>, vector<1x16x32xf32>
    tpu.vector_store %arg13[%c0_40, %c0_41, %c0_42], %70 {strides = array<i32>} : memref<1x16x32xf32, #tpu.memory_space<vmem>>, vector<1x16x32xf32>,
    return
  }
  func.func @transform_0(%arg0: i32, %arg1: i32) -> (i32, i32, i32) {
    %c0_i32 = arith.constant 0 : i32
    %c0_i32_0 = arith.constant 0 : i32
    return %arg0, %arg1, %c0_i32 : i32, i32, i32
  }
  func.func @transform_1(%arg0: i32, %arg1: i32) -> (i32, i32, i32) {
    %c2_i32 = arith.constant 2 : i32
    %0 = arith.muli %arg1, %c2_i32 : i32
    %c1_i32 = arith.constant 1 : i32
    %1 = arith.subi %0, %c1_i32 : i32
    %c0_i32 = arith.constant 0 : i32
    %2 = arith.maxsi %1, %c0_i32 : i32
    %c0_i32_0 = arith.constant 0 : i32
    %c0_i32_1 = arith.constant 0 : i32
    return %arg0, %2, %c0_i32_0 : i32, i32, i32
  }
  func.func @transform_2(%arg0: i32, %arg1: i32) -> (i32, i32, i32) {
    %c2_i32 = arith.constant 2 : i32
    %0 = arith.muli %arg1, %c2_i32 : i32
    %c2_i32_0 = arith.constant 2 : i32
    %1 = arith.addi %0, %c2_i32_0 : i32
    %c7_i32 = arith.constant 7 : i32
    %2 = arith.minsi %1, %c7_i32 : i32
    %c0_i32 = arith.constant 0 : i32
    %c0_i32_1 = arith.constant 0 : i32
    return %arg0, %2, %c0_i32 : i32, i32, i32
  }
  func.func @transform_3(%arg0: i32, %arg1: i32) -> (i32, i32) {
    %c0_i32 = arith.constant 0 : i32
    %c0_i32_0 = arith.constant 0 : i32
    %c0_i32_1 = arith.constant 0 : i32
    return %c0_i32, %c0_i32_0 : i32, i32
  }
  func.func @transform_4(%arg0: i32, %arg1: i32) -> (i32, i32) {
    %c0_i32 = arith.constant 0 : i32
    %c0_i32_0 = arith.constant 0 : i32
    %c0_i32_1 = arith.constant 0 : i32
    return %c0_i32, %c0_i32_0 : i32, i32
  }
  func.func @transform_5(%arg0: i32, %arg1: i32) -> (i32, i32) {
    %c0_i32 = arith.constant 0 : i32
    %c0_i32_0 = arith.constant 0 : i32
    %c0_i32_1 = arith.constant 0 : i32
    return %c0_i32, %c0_i32_0 : i32, i32
  }
  func.func @transform_6(%arg0: i32, %arg1: i32) -> (i32, i32) {
    %c0_i32 = arith.constant 0 : i32
    %c0_i32_0 = arith.constant 0 : i32
    %c0_i32_1 = arith.constant 0 : i32
    return %c0_i32, %c0_i32_0 : i32, i32
  }
  func.func @transform_7(%arg0: i32, %arg1: i32) -> (i32, i32) {
    %c0_i32 = arith.constant 0 : i32
    %c0_i32_0 = arith.constant 0 : i32
    %c0_i32_1 = arith.constant 0 : i32
    return %c0_i32, %c0_i32_0 : i32, i32
  }
  func.func @transform_8(%arg0: i32, %arg1: i32) -> (i32, i32) {
    %c0_i32 = arith.constant 0 : i32
    %c0_i32_0 = arith.constant 0 : i32
    %c0_i32_1 = arith.constant 0 : i32
    return %c0_i32, %c0_i32_0 : i32, i32
  }
  func.func @transform_9(%arg0: i32, %arg1: i32) -> (i32, i32) {
    %c0_i32 = arith.constant 0 : i32
    %c0_i32_0 = arith.constant 0 : i32
    %c0_i32_1 = arith.constant 0 : i32
    return %c0_i32, %c0_i32_0 : i32, i32
  }
  func.func @transform_10(%arg0: i32, %arg1: i32) -> (i32, i32) {
    %c0_i32 = arith.constant 0 : i32
    %c0_i32_0 = arith.constant 0 : i32
    %c0_i32_1 = arith.constant 0 : i32
    return %c0_i32, %c0_i32_0 : i32, i32
  }
  func.func @transform_11(%arg0: i32, %arg1: i32) -> (i32, i32, i32) {
    %c0_i32 = arith.constant 0 : i32
    %c0_i32_0 = arith.constant 0 : i32
    return %arg0, %arg1, %c0_i32 : i32, i32, i32
  }
}

</mosaic_0001>

<llo_original>
// kernel: tpu_custom_call.1
$region0: #{tpu_custom_call.1}
  #allocation0 [shape = 'u32[]', space=smem, size = 0x4, offset = 0x4, fixed_abs, tag = 'smem constant byte address 0x4 - core index']
  #allocation1 [shape = 'u32[144,128]{1,0:T(1,128)}', space=vmem, size = 0x12000, scoped, tag = 'internal scratch']
  %s0 = inlined_call_operand.vmem [shape: f32[2,64,32], index: 0, kind: input, shape index: {}]
  %s1 = inlined_call_operand.vmem [shape: f32[2,64,32], index: 1, kind: input, shape index: {}]
  %s2 = inlined_call_operand.vmem [shape: f32[2,64,32], index: 2, kind: input, shape index: {}]
  %s3 = inlined_call_operand.vmem [shape: f32[16,1], index: 3, kind: input, shape index: {}]
  %s4 = inlined_call_operand.vmem [shape: f32[16,1], index: 4, kind: input, shape index: {}]
  %s5 = inlined_call_operand.vmem [shape: bf16[32,8], index: 5, kind: input, shape index: {}]
  %s6 = inlined_call_operand.vmem [shape: f32[1,8], index: 6, kind: input, shape index: {}]
  %s7 = inlined_call_operand.vmem [shape: bf16[24,24], index: 7, kind: input, shape index: {}]
  %s8 = inlined_call_operand.vmem [shape: f32[1,8], index: 8, kind: input, shape index: {}]
  %s9 = inlined_call_operand.vmem [shape: bf16[8,32], index: 9, kind: input, shape index: {}]
  %s10 = inlined_call_operand.vmem [shape: f32[1,32], index: 10, kind: input, shape index: {}]
  %s11 = inlined_call_operand.vmem [shape: f32[2,64,32], index: 11, kind: output, shape index: {}]
  %s12 = sld [smem:[#allocation0]]
  $region77: #{tpu_custom_call.1} parent=0
    _
  %s14 = ssub.s32 1, %s12
  %s15 = scalar_select 0, %s14, %s12
  loop: start=0, step=1, limit=10
  $region2: #{tpu_custom_call.1} parent=0 // loop_pre_header
    _
  $region3: #{tpu_custom_call.1} parent=0 // loop_header
    %s17 = sphi 0, %s21
    %p18 = scmp.ge.s32.totalorder %s17, 10
    %s24 = sphi 0, %s36
    %s25 = sphi 0, %s32
    %s26 = sphi 0, %s24
    %s27 = sphi 0, %s25
    %s28 = sphi 0, %s26
    %s29 = sphi 0, %s27
    %s41 = sphi 0, %s43
    %s44 = sphi 0, %s41
    %s45 = sphi 0, %s44
    %s61 = sphi 0, %s45
    %s77 = sphi 0, %s79
    %s80 = sphi 0, %s77
    %s81 = sphi 0, %s80
    %s97 = sphi 0, %s81
    %s113 = sphi 0, %s115
    %s116 = sphi 0, %s113
    %s117 = sphi 0, %s116
    %s133 = sphi 0, %s117
    %s137 = sphi 0, %s137
    %s139 = sphi 0, %s137
    %s140 = sphi 0, %s139
    %s154 = sphi 0, %s140
    %s158 = sphi 0, %s158
    %s160 = sphi 0, %s158
    %s161 = sphi 0, %s160
    %s175 = sphi 0, %s161
    %s179 = sphi 0, %s179
    %s181 = sphi 0, %s179
    %s182 = sphi 0, %s181
    %s196 = sphi 0, %s182
    %s200 = sphi 0, %s200
    %s202 = sphi 0, %s200
    %s203 = sphi 0, %s202
    %s217 = sphi 0, %s203
    %s221 = sphi 0, %s221
    %s223 = sphi 0, %s221
    %s224 = sphi 0, %s223
    %s238 = sphi 0, %s224
    %s242 = sphi 0, %s242
    %s244 = sphi 0, %s242
    %s245 = sphi 0, %s244
    %s259 = sphi 0, %s245
    %s263 = sphi 0, %s263
    %s265 = sphi 0, %s263
    %s266 = sphi 0, %s265
    %s280 = sphi 0, %s266
    %s284 = sphi 0, %s284
    %s286 = sphi 0, %s284
    %s287 = sphi 0, %s286
    %s301 = sphi 0, %s287
    %s309 = sphi 0, %s311
    %s312 = sphi 0, %s309
    %s313 = sphi 0, %s312
    %s329 = sphi 0, %s313
  $region4: #{tpu_custom_call.1} parent=0 // loop_header_branch
    %20 = sbr.rel (%p18) target = $region8
  $region5: #{tpu_custom_call.1} parent=0 // loop_body
    %s22 = ssub.s32 %s17, 1
    %s23 = ssub.s32 %s17, 2
    %s30 = sadd.s32 1, %s25
    %p31 = scmp.ge.s32.totalorder %s30, 4
    %s32 = scalar_select %p31, 0, %s30
    %s33 = sadd.s32 1, %s24
    %s34 = scalar_select %p31, %s33, %s24
    %p35 = scmp.ge.s32.totalorder %s34, 2
    %s36 = scalar_select %p35, 0, %s34
    %s37 = ssub.s32 %s24, %s36
    %s38 = ssub.s32 %s25, %s32
    %s39 = sor.u32 %s37, %s38
    %p40 = scmp.eq.s32.totalorder %s39, 0
    %s42 = sadd.s32 %s41, 1
    %s43 = scalar_select %p40, %s41, %s42
    %p46 = pneg %p40
    %p47 = scmp.eq.s32.totalorder %s17, 7
    %p48 = por %p46, %p47
    %p49 = scmp.ne.s32.totalorder %s41, %s44
    %p50 = scmp.eq.s32.totalorder %s17, 0
    %p51 = por %p49, %p50
    %p52 = scmp.ne.s32.totalorder %s41, %s44
    %p53 = scmp.eq.s32.totalorder %s22, 7
    %p54 = por %p52, %p53
    %p55 = scmp.ne.s32.totalorder %s44, %s45
    %p56 = scmp.eq.s32.totalorder %s22, 0
    %p57 = por %p55, %p56
    %p58 = scmp.ne.s32.totalorder %s44, %s45
    %p59 = scmp.eq.s32.totalorder %s23, 7
    %p60 = por %p58, %p59
    %p62 = scmp.ne.s32.totalorder %s45, %s61
    %p63 = scmp.eq.s32.totalorder %s23, 0
    %p64 = por %p62, %p63
    %s65 = smul.u32 %s25, 2
    %s66 = ssub.s32 %s65, 1
    %p67 = scmp.gt.s32.totalorder %s66, 0
    %s68 = scalar_select %p67, %s66, 0
    %s69 = smul.u32 %s32, 2
    %s70 = ssub.s32 %s69, 1
    %p71 = scmp.gt.s32.totalorder %s70, 0
    %s72 = scalar_select %p71, %s70, 0
    %s73 = ssub.s32 %s24, %s36
    %s74 = ssub.s32 %s68, %s72
    %s75 = sor.u32 %s73, %s74
    %p76 = scmp.eq.s32.totalorder %s75, 0
    %s78 = sadd.s32 %s77, 1
    %s79 = scalar_select %p76, %s77, %s78
    %p82 = pneg %p76
    %p83 = scmp.eq.s32.totalorder %s17, 7
    %p84 = por %p82, %p83
    %p85 = scmp.ne.s32.totalorder %s77, %s80
    %p86 = scmp.eq.s32.totalorder %s17, 0
    %p87 = por %p85, %p86
    %p88 = scmp.ne.s32.totalorder %s77, %s80
    %p89 = scmp.eq.s32.totalorder %s22, 7
    %p90 = por %p88, %p89
    %p91 = scmp.ne.s32.totalorder %s80, %s81
    %p92 = scmp.eq.s32.totalorder %s22, 0
    %p93 = por %p91, %p92
    %p94 = scmp.ne.s32.totalorder %s80, %s81
    %p95 = scmp.eq.s32.totalorder %s23, 7
    %p96 = por %p94, %p95
    %p98 = scmp.ne.s32.totalorder %s81, %s97
    %p99 = scmp.eq.s32.totalorder %s23, 0
    %p100 = por %p98, %p99
    %s101 = smul.u32 %s25, 2
    %s102 = sadd.s32 %s101, 2
    %p103 = scmp.lt.s32.totalorder %s102, 7
    %s104 = scalar_select %p103, %s102, 7
    %s105 = smul.u32 %s32, 2
    %s106 = sadd.s32 %s105, 2
    %p107 = scmp.lt.s32.totalorder %s106, 7
    %s108 = scalar_select %p107, %s106, 7
    %s109 = ssub.s32 %s24, %s36
    %s110 = ssub.s32 %s104, %s108
    %s111 = sor.u32 %s109, %s110
    %p112 = scmp.eq.s32.totalorder %s111, 0
    %s114 = sadd.s32 %s113, 1
    %s115 = scalar_select %p112, %s113, %s114
    %p118 = pneg %p112
    %p119 = scmp.eq.s32.totalorder %s17, 7
    %p120 = por %p118, %p119
    %p121 = scmp.ne.s32.totalorder %s113, %s116
    %p122 = scmp.eq.s32.totalorder %s17, 0
    %p123 = por %p121, %p122
    %p124 = scmp.ne.s32.totalorder %s113, %s116
    %p125 = scmp.eq.s32.totalorder %s22, 7
    %p126 = por %p124, %p125
    %p127 = scmp.ne.s32.totalorder %s116, %s117
    %p128 = scmp.eq.s32.totalorder %s22, 0
    %p129 = por %p127, %p128
    %p130 = scmp.ne.s32.totalorder %s116, %s117
    %p131 = scmp.eq.s32.totalorder %s23, 7
    %p132 = por %p130, %p131
    %p134 = scmp.ne.s32.totalorder %s117, %s133
    %p135 = scmp.eq.s32.totalorder %s23, 0
    %p136 = por %p134, %p135
    %s138 = sadd.s32 %s137, 1
    %p141 = scmp.eq.s32.totalorder %s17, 7
    %p142 = scmp.ne.s32.totalorder %s137, %s139
    %p143 = scmp.eq.s32.totalorder %s17, 0
    %p144 = por %p142, %p143
    %p145 = scmp.ne.s32.totalorder %s137, %s139
    %p146 = scmp.eq.s32.totalorder %s22, 7
    %p147 = por %p145, %p146
    %p148 = scmp.ne.s32.totalorder %s139, %s140
    %p149 = scmp.eq.s32.totalorder %s22, 0
    %p150 = por %p148, %p149
    %p151 = scmp.ne.s32.totalorder %s139, %s140
    %p152 = scmp.eq.s32.totalorder %s23, 7
    %p153 = por %p151, %p152
    %p155 = scmp.ne.s32.totalorder %s140, %s154
    %p156 = scmp.eq.s32.totalorder %s23, 0
    %p157 = por %p155, %p156
    %s159 = sadd.s32 %s158, 1
    %p162 = scmp.eq.s32.totalorder %s17, 7
    %p163 = scmp.ne.s32.totalorder %s158, %s160
    %p164 = scmp.eq.s32.totalorder %s17, 0
    %p165 = por %p163, %p164
    %p166 = scmp.ne.s32.totalorder %s158, %s160
    %p167 = scmp.eq.s32.totalorder %s22, 7
    %p168 = por %p166, %p167
    %p169 = scmp.ne.s32.totalorder %s160, %s161
    %p170 = scmp.eq.s32.totalorder %s22, 0
    %p171 = por %p169, %p170
    %p172 = scmp.ne.s32.totalorder %s160, %s161
    %p173 = scmp.eq.s32.totalorder %s23, 7
    %p174 = por %p172, %p173
    %p176 = scmp.ne.s32.totalorder %s161, %s175
    %p177 = scmp.eq.s32.totalorder %s23, 0
    %p178 = por %p176, %p177
    %s180 = sadd.s32 %s179, 1
    %p183 = scmp.eq.s32.totalorder %s17, 7
    %p184 = scmp.ne.s32.totalorder %s179, %s181
    %p185 = scmp.eq.s32.totalorder %s17, 0
    %p186 = por %p184, %p185
    %p187 = scmp.ne.s32.totalorder %s179, %s181
    %p188 = scmp.eq.s32.totalorder %s22, 7
    %p189 = por %p187, %p188
    %p190 = scmp.ne.s32.totalorder %s181, %s182
    %p191 = scmp.eq.s32.totalorder %s22, 0
    %p192 = por %p190, %p191
    %p193 = scmp.ne.s32.totalorder %s181, %s182
    %p194 = scmp.eq.s32.totalorder %s23, 7
    %p195 = por %p193, %p194
    %p197 = scmp.ne.s32.totalorder %s182, %s196
    %p198 = scmp.eq.s32.totalorder %s23, 0
    %p199 = por %p197, %p198
    %s201 = sadd.s32 %s200, 1
    %p204 = scmp.eq.s32.totalorder %s17, 7
    %p205 = scmp.ne.s32.totalorder %s200, %s202
    %p206 = scmp.eq.s32.totalorder %s17, 0
    %p207 = por %p205, %p206
    %p208 = scmp.ne.s32.totalorder %s200, %s202
    %p209 = scmp.eq.s32.totalorder %s22, 7
    %p210 = por %p208, %p209
    %p211 = scmp.ne.s32.totalorder %s202, %s203
    %p212 = scmp.eq.s32.totalorder %s22, 0
    %p213 = por %p211, %p212
    %p214 = scmp.ne.s32.totalorder %s202, %s203
    %p215 = scmp.eq.s32.totalorder %s23, 7
    %p216 = por %p214, %p215
    %p218 = scmp.ne.s32.totalorder %s203, %s217
    %p219 = scmp.eq.s32.totalorder %s23, 0
    %p220 = por %p218, %p219
    %s222 = sadd.s32 %s221, 1
    %p225 = scmp.eq.s32.totalorder %s17, 7
    %p226 = scmp.ne.s32.totalorder %s221, %s223
    %p227 = scmp.eq.s32.totalorder %s17, 0
    %p228 = por %p226, %p227
    %p229 = scmp.ne.s32.totalorder %s221, %s223
    %p230 = scmp.eq.s32.totalorder %s22, 7
    %p231 = por %p229, %p230
    %p232 = scmp.ne.s32.totalorder %s223, %s224
    %p233 = scmp.eq.s32.totalorder %s22, 0
    %p234 = por %p232, %p233
    %p235 = scmp.ne.s32.totalorder %s223, %s224
    %p236 = scmp.eq.s32.totalorder %s23, 7
    %p237 = por %p235, %p236
    %p239 = scmp.ne.s32.totalorder %s224, %s238
    %p240 = scmp.eq.s32.totalorder %s23, 0
    %p241 = por %p239, %p240
    %s243 = sadd.s32 %s242, 1
    %p246 = scmp.eq.s32.totalorder %s17, 7
    %p247 = scmp.ne.s32.totalorder %s242, %s244
    %p248 = scmp.eq.s32.totalorder %s17, 0
    %p249 = por %p247, %p248
    %p250 = scmp.ne.s32.totalorder %s242, %s244
    %p251 = scmp.eq.s32.totalorder %s22, 7
    %p252 = por %p250, %p251
    %p253 = scmp.ne.s32.totalorder %s244, %s245
    %p254 = scmp.eq.s32.totalorder %s22, 0
    %p255 = por %p253, %p254
    %p256 = scmp.ne.s32.totalorder %s244, %s245
    %p257 = scmp.eq.s32.totalorder %s23, 7
    %p258 = por %p256, %p257
    %p260 = scmp.ne.s32.totalorder %s245, %s259
    %p261 = scmp.eq.s32.totalorder %s23, 0
    %p262 = por %p260, %p261
    %s264 = sadd.s32 %s263, 1
    %p267 = scmp.eq.s32.totalorder %s17, 7
    %p268 = scmp.ne.s32.totalorder %s263, %s265
    %p269 = scmp.eq.s32.totalorder %s17, 0
    %p270 = por %p268, %p269
    %p271 = scmp.ne.s32.totalorder %s263, %s265
    %p272 = scmp.eq.s32.totalorder %s22, 7
    %p273 = por %p271, %p272
    %p274 = scmp.ne.s32.totalorder %s265, %s266
    %p275 = scmp.eq.s32.totalorder %s22, 0
    %p276 = por %p274, %p275
    %p277 = scmp.ne.s32.totalorder %s265, %s266
    %p278 = scmp.eq.s32.totalorder %s23, 7
    %p279 = por %p277, %p278
    %p281 = scmp.ne.s32.totalorder %s266, %s280
    %p282 = scmp.eq.s32.totalorder %s23, 0
    %p283 = por %p281, %p282
    %s285 = sadd.s32 %s284, 1
    %p288 = scmp.eq.s32.totalorder %s17, 7
    %p289 = scmp.ne.s32.totalorder %s284, %s286
    %p290 = scmp.eq.s32.totalorder %s17, 0
    %p291 = por %p289, %p290
    %p292 = scmp.ne.s32.totalorder %s284, %s286
    %p293 = scmp.eq.s32.totalorder %s22, 7
    %p294 = por %p292, %p293
    %p295 = scmp.ne.s32.totalorder %s286, %s287
    %p296 = scmp.eq.s32.totalorder %s22, 0
    %p297 = por %p295, %p296
    %p298 = scmp.ne.s32.totalorder %s286, %s287
    %p299 = scmp.eq.s32.totalorder %s23, 7
    %p300 = por %p298, %p299
    %p302 = scmp.ne.s32.totalorder %s287, %s301
    %p303 = scmp.eq.s32.totalorder %s23, 0
    %p304 = por %p302, %p303
    %s305 = ssub.s32 %s24, %s36
    %s306 = ssub.s32 %s25, %s32
    %s307 = sor.u32 %s305, %s306
    %p308 = scmp.eq.s32.totalorder %s307, 0
    %s310 = sadd.s32 %s309, 1
    %s311 = scalar_select %p308, %s309, %s310
    %p314 = pneg %p308
    %p315 = scmp.eq.s32.totalorder %s17, 7
    %p316 = por %p314, %p315
    %p317 = scmp.ne.s32.totalorder %s309, %s312
    %p318 = scmp.eq.s32.totalorder %s17, 0
    %p319 = por %p317, %p318
    %p320 = scmp.ne.s32.totalorder %s309, %s312
    %p321 = scmp.eq.s32.totalorder %s22, 7
    %p322 = por %p320, %p321
    %p323 = scmp.ne.s32.totalorder %s312, %s313
    %p324 = scmp.eq.s32.totalorder %s22, 0
    %p325 = por %p323, %p324
    %p326 = scmp.ne.s32.totalorder %s312, %s313
    %p327 = scmp.eq.s32.totalorder %s23, 7
    %p328 = por %p326, %p327
    %p330 = scmp.ne.s32.totalorder %s313, %s329
    %p331 = scmp.eq.s32.totalorder %s23, 0
    %p332 = por %p330, %p331
    %p333 = scmp.le.s32.totalorder 1, %s17
    %p334 = scmp.lt.s32.totalorder %s17, 9
    %p335 = pnand %p333, %p334
    %p336 = pneg %p335
    // Predicated region
    $region9: #{tpu_custom_call.1} parent=5 // pred_check
      _
    $region10: #{tpu_custom_call.1} parent=5 // pred_check_branch
      %338 = sbr.rel (%p335) target = $region12
    $region11: #{tpu_custom_call.1} parent=5 // pred_region
      %s339 = ssub.s32 %s17, 1
      // Predicated region
      $region13: #{tpu_custom_call.1} parent=11 // pred_check
        %p340 = pneg %p150
      $region14: #{tpu_custom_call.1} parent=11 // pred_check_branch
        %342 = sbr.rel (%p340) target = $region16
      $region15: #{tpu_custom_call.1} parent=11 // pred_region
        _
      $region16: #{tpu_custom_call.1} parent=11 // pred_fallthru
        _
      // Predicated region
      $region17: #{tpu_custom_call.1} parent=11 // pred_check
        %p343 = pneg %p171
      $region18: #{tpu_custom_call.1} parent=11 // pred_check_branch
        %345 = sbr.rel (%p343) target = $region20
      $region19: #{tpu_custom_call.1} parent=11 // pred_region
        _
      $region20: #{tpu_custom_call.1} parent=11 // pred_fallthru
        _
      // Predicated region
      $region21: #{tpu_custom_call.1} parent=11 // pred_check
        %p346 = pneg %p192
      $region22: #{tpu_custom_call.1} parent=11 // pred_check_branch
        %348 = sbr.rel (%p346) target = $region24
      $region23: #{tpu_custom_call.1} parent=11 // pred_region
        _
      $region24: #{tpu_custom_call.1} parent=11 // pred_fallthru
        _
      // Predicated region
      $region25: #{tpu_custom_call.1} parent=11 // pred_check
        %p349 = pneg %p213
      $region26: #{tpu_custom_call.1} parent=11 // pred_check_branch
        %351 = sbr.rel (%p349) target = $region28
      $region27: #{tpu_custom_call.1} parent=11 // pred_region
        _
      $region28: #{tpu_custom_call.1} parent=11 // pred_fallthru
        _
      // Predicated region
      $region29: #{tpu_custom_call.1} parent=11 // pred_check
        %p352 = pneg %p234
      $region30: #{tpu_custom_call.1} parent=11 // pred_check_branch
        %354 = sbr.rel (%p352) target = $region32
      $region31: #{tpu_custom_call.1} parent=11 // pred_region
        _
      $region32: #{tpu_custom_call.1} parent=11 // pred_fallthru
        _
      // Predicated region
      $region33: #{tpu_custom_call.1} parent=11 // pred_check
        %p355 = pneg %p255
      $region34: #{tpu_custom_call.1} parent=11 // pred_check_branch
        %357 = sbr.rel (%p355) target = $region36
      $region35: #{tpu_custom_call.1} parent=11 // pred_region
        _
      $region36: #{tpu_custom_call.1} parent=11 // pred_fallthru
        _
      // Predicated region
      $region37: #{tpu_custom_call.1} parent=11 // pred_check
        %p358 = pneg %p276
      $region38: #{tpu_custom_call.1} parent=11 // pred_check_branch
        %360 = sbr.rel (%p358) target = $region40
      $region39: #{tpu_custom_call.1} parent=11 // pred_region
        _
      $region40: #{tpu_custom_call.1} parent=11 // pred_fallthru
        _
      // Predicated region
      $region41: #{tpu_custom_call.1} parent=11 // pred_check
        %p361 = pneg %p297
      $region42: #{tpu_custom_call.1} parent=11 // pred_check_branch
        %363 = sbr.rel (%p361) target = $region44
      $region43: #{tpu_custom_call.1} parent=11 // pred_region
        _
      $region44: #{tpu_custom_call.1} parent=11 // pred_fallthru
        _
    $region12: #{tpu_custom_call.1} parent=5 // pred_fallthru
      _
    %p364 = scmp.lt.s32.totalorder %s17, 8
    // Predicated region
    $region45: #{tpu_custom_call.1} parent=5 // pred_check
      %p365 = pneg %p364
    $region46: #{tpu_custom_call.1} parent=5 // pred_check_branch
      %367 = sbr.rel (%p365) target = $region48
    $region47: #{tpu_custom_call.1} parent=5 // pred_region
      // Predicated region
      $region49: #{tpu_custom_call.1} parent=47 // pred_check
        %p368 = pneg %p51
      $region50: #{tpu_custom_call.1} parent=47 // pred_check_branch
        %370 = sbr.rel (%p368) target = $region52
      $region51: #{tpu_custom_call.1} parent=47 // pred_region
        %s371 = smul.u32 2, %s25
        %p372 = scmp.lt.s32.totalorder %s24, 1
        %s373 = scalar_select %p372, %s24, 1
        %p374 = scmp.lt.s32.totalorder %s371, 7
        %s375 = scalar_select %p374, %s371, 7
        %s376 = smul.addr %s373, 8
        %s377 = sadd.s32 %s375, %s376
        %s378 = smul.addr %s377, 8
        %s379 = scalar_lea.vmem %s0, %s378
        %s380 = smul.u32 2, %s25
      $region52: #{tpu_custom_call.1} parent=47 // pred_fallthru
        _
      // Predicated region
      $region53: #{tpu_custom_call.1} parent=47 // pred_check
        %p381 = pneg %p87
      $region54: #{tpu_custom_call.1} parent=47 // pred_check_branch
        %383 = sbr.rel (%p381) target = $region56
      $region55: #{tpu_custom_call.1} parent=47 // pred_region
        %s384 = smul.u32 %s25, 2
        %s385 = ssub.s32 %s384, 1
        %p386 = scmp.gt.s32.totalorder %s385, 0
        %s387 = scalar_select %p386, %s385, 0
        %p388 = scmp.lt.s32.totalorder %s24, 1
        %s389 = scalar_select %p388, %s24, 1
        %p390 = scmp.lt.s32.totalorder %s387, 7
        %s391 = scalar_select %p390, %s387, 7
        %s392 = smul.addr %s389, 8
        %s393 = sadd.s32 %s391, %s392
        %s394 = smul.addr %s393, 8
        %s395 = scalar_lea.vmem %s1, %s394
        %s396 = smul.u32 %s25, 2
        %s397 = ssub.s32 %s396, 1
        %p398 = scmp.gt.s32.totalorder %s397, 0
        %s399 = scalar_select %p398, %s397, 0
      $region56: #{tpu_custom_call.1} parent=47 // pred_fallthru
        _
      // Predicated region
      $region57: #{tpu_custom_call.1} parent=47 // pred_check
        %p400 = pneg %p123
      $region58: #{tpu_custom_call.1} parent=47 // pred_check_branch
        %402 = sbr.rel (%p400) target = $region60
      $region59: #{tpu_custom_call.1} parent=47 // pred_region
        %s403 = smul.u32 %s25, 2
        %s404 = sadd.s32 %s403, 2
        %p405 = scmp.lt.s32.totalorder %s404, 7
        %s406 = scalar_select %p405, %s404, 7
        %p407 = scmp.lt.s32.totalorder %s24, 1
        %s408 = scalar_select %p407, %s24, 1
        %p409 = scmp.lt.s32.totalorder %s406, 7
        %s410 = scalar_select %p409, %s406, 7
        %s411 = smul.addr %s408, 8
        %s412 = sadd.s32 %s410, %s411
        %s413 = smul.addr %s412, 8
        %s414 = scalar_lea.vmem %s2, %s413
        %s415 = smul.u32 %s25, 2
        %s416 = sadd.s32 %s415, 2
        %p417 = scmp.lt.s32.totalorder %s416, 7
        %s418 = scalar_select %p417, %s416, 7
      $region60: #{tpu_custom_call.1} parent=47 // pred_fallthru
        _
    $region48: #{tpu_custom_call.1} parent=5 // pred_fallthru
      _
    %p419 = scmp.le.s32.totalorder 1, %s17
    %p420 = scmp.lt.s32.totalorder %s17, 9
    %p421 = pnand %p419, %p420
    %p422 = pneg %p421
    // Predicated region
    $region61: #{tpu_custom_call.1} parent=5 // pred_check
      _
    $region62: #{tpu_custom_call.1} parent=5 // pred_check_branch
      %424 = sbr.rel (%p421) target = $region64
    $region63: #{tpu_custom_call.1} parent=5 // pred_region
      %s425 = ssub.s32 %s17, 1
      %s426 = smul.u32 2, %s27
      %p427 = scmp.lt.s32.totalorder %s26, 1
      %s428 = scalar_select %p427, %s26, 1
      %p429 = scmp.lt.s32.totalorder %s426, 7
      %s430 = scalar_select %p429, %s426, 7
      %s431 = smul.addr %s428, 8
      %s432 = sadd.s32 %s430, %s431
      %s433 = smul.addr %s432, 8
      %s434 = scalar_lea.vmem %s0, %s433
      %p435 = pneg %p57
      %p436 = pneg %p54
      %s437 = smul.u32 %s27, 2
      %s438 = ssub.s32 %s437, 1
      %p439 = scmp.gt.s32.totalorder %s438, 0
      %s440 = scalar_select %p439, %s438, 0
      %p441 = scmp.lt.s32.totalorder %s26, 1
      %s442 = scalar_select %p441, %s26, 1
      %p443 = scmp.lt.s32.totalorder %s440, 7
      %s444 = scalar_select %p443, %s440, 7
      %s445 = smul.addr %s442, 8
      %s446 = sadd.s32 %s444, %s445
      %s447 = smul.addr %s446, 8
      %s448 = scalar_lea.vmem %s1, %s447
      %p449 = pneg %p93
      %p450 = pneg %p90
      %s451 = smul.u32 %s27, 2
      %s452 = sadd.s32 %s451, 2
      %p453 = scmp.lt.s32.totalorder %s452, 7
      %s454 = scalar_select %p453, %s452, 7
      %p455 = scmp.lt.s32.totalorder %s26, 1
      %s456 = scalar_select %p455, %s26, 1
      %p457 = scmp.lt.s32.totalorder %s454, 7
      %s458 = scalar_select %p457, %s454, 7
      %s459 = smul.addr %s456, 8
      %s460 = sadd.s32 %s458, %s459
      %s461 = smul.addr %s460, 8
      %s462 = scalar_lea.vmem %s2, %s461
      %p463 = pneg %p129
      %p464 = pneg %p126
      %p465 = pneg %p150
      %p466 = pneg %p147
      %p467 = pneg %p171
      %p468 = pneg %p168
      %p469 = pneg %p192
      %p470 = pneg %p189
      %p471 = pneg %p213
      %p472 = pneg %p210
      %p473 = pneg %p234
      %p474 = pneg %p231
      %p475 = pneg %p255
      %p476 = pneg %p252
      %p477 = pneg %p276
      %p478 = pneg %p273
      %p479 = pneg %p297
      %p480 = pneg %p294
      %p481 = pneg %p325
      %p482 = pneg %p322
      %s483 = smul.u32 2, %s27
      %p484 = scmp.lt.s32.totalorder %s26, 1
      %s485 = scalar_select %p484, %s26, 1
      %p486 = scmp.lt.s32.totalorder %s483, 7
      %s487 = scalar_select %p486, %s483, 7
      %s488 = smul.addr %s485, 8
      %s489 = sadd.s32 %s487, %s488
      %s490 = smul.addr %s489, 8
      %s491 = scalar_lea.vmem %s11, %s490
      %s492 = smul.u32 2, %s27
      %p493 = scmp.lt.s32.totalorder %s26, 1
      %s494 = scalar_select %p493, %s26, 1
      %p495 = scmp.lt.s32.totalorder %s492, 7
      %s496 = scalar_select %p495, %s492, 7
      %s497 = smul.addr %s494, 8
      %s498 = sadd.s32 %s496, %s497
      %s499 = smul.addr %s498, 8
      %s500 = scalar_lea.vmem %s0, %s499
      %s501 = smul.u32 2, %s27
      %s502 = smul.u32 %s27, 2
      %s503 = ssub.s32 %s502, 1
      %p504 = scmp.gt.s32.totalorder %s503, 0
      %s505 = scalar_select %p504, %s503, 0
      %p506 = scmp.lt.s32.totalorder %s26, 1
      %s507 = scalar_select %p506, %s26, 1
      %p508 = scmp.lt.s32.totalorder %s505, 7
      %s509 = scalar_select %p508, %s505, 7
      %s510 = smul.addr %s507, 8
      %s511 = sadd.s32 %s509, %s510
      %s512 = smul.addr %s511, 8
      %s513 = scalar_lea.vmem %s1, %s512
      %s514 = smul.u32 %s27, 2
      %s515 = ssub.s32 %s514, 1
      %p516 = scmp.gt.s32.totalorder %s515, 0
      %s517 = scalar_select %p516, %s515, 0
      %s518 = smul.u32 %s27, 2
      %s519 = sadd.s32 %s518, 2
      %p520 = scmp.lt.s32.totalorder %s519, 7
      %s521 = scalar_select %p520, %s519, 7
      %p522 = scmp.lt.s32.totalorder %s26, 1
      %s523 = scalar_select %p522, %s26, 1
      %p524 = scmp.lt.s32.totalorder %s521, 7
      %s525 = scalar_select %p524, %s521, 7
      %s526 = smul.addr %s523, 8
      %s527 = sadd.s32 %s525, %s526
      %s528 = smul.addr %s527, 8
      %s529 = scalar_lea.vmem %s2, %s528
      %s530 = smul.u32 %s27, 2
      %s531 = sadd.s32 %s530, 2
      %p532 = scmp.lt.s32.totalorder %s531, 7
      %s533 = scalar_select %p532, %s531, 7
      %s534 = smul.u32 2, %s27
      %p535 = scmp.lt.s32.totalorder %s26, 1
      %s536 = scalar_select %p535, %s26, 1
      %p537 = scmp.lt.s32.totalorder %s534, 7
      %s538 = scalar_select %p537, %s534, 7
      %s539 = smul.addr %s536, 8
      %s540 = sadd.s32 %s538, %s539
      %s541 = smul.addr %s540, 8
      %s542 = scalar_lea.vmem %s11, %s541
      %s543 = smul.u32 2, %s27
      %p545 = scmp.eq.s32.totalorder %s27, 0
      %p546 = scmp.eq.s32.totalorder %s27, 3
      %v547 = vld [vmem:[%s500] sm:$0xff]
      %v548 = vld [vmem:[%s500 + $0x8] sm:$0xff]
      %v549 = vpack.c.bf16 %v548, %v547
      %v550 = vld [vmem:[%s513] sm:$0xff]
      %v551 = vld [vmem:[%s529] sm:$0xff]
      %v552 = vpack.c.bf16 %v551, %v550
      %v553 = vld [vmem:[%s5] sm:$0xf]
      %v554 = vld [vmem:[%s5 + $0x4] sm:$0xf]
      %v555 = vld [vmem:[%s5 + $0x8] sm:$0xf]
      %v556 = vld [vmem:[%s5 + $0xc] sm:$0xf]
      %v557 = vld [vmem:[%s6] sm:$0x1]
      %v559 = vlaneseq
      %v560 = vshrl.u32 %v559, 7
      %v561 = vsub.s32 0, %v560
      %v562 = vrot.slane %v557, %v561
      %v568 = vunpack.c.l.b16 %v553
      %v569 = vunpack.c.l.b16 %v554
      %v570 = vunpack.c.l.b16 %v555
      %v571 = vunpack.c.l.b16 %v556
      %v572 = vpack.c.b16 %v569, %v568
      %v573 = vpack.c.b16 %v571, %v570
      %vm576 = vcmask 261120
      %v578 = vsel %vm576, %v549, 0
      %580 = vmatprep.subr.bf16.mxu0 0
      %581 = vmatpush1.bf16.msra.mxu0 %v572
      %582 = vmatprep.subr.bf16.mxu0 0
      %583 = vmatpush1.bf16.msra.mxu0 %v573
      %584 = vmatprep.subr.bf16.mxu0 0
      %585 = vmatpush1.bf16.msra.mxu0 0
      %586 = vmatprep.subr.bf16.mxu0 0
      %587 = vmatpush1.bf16.msra.mxu0 0
      %588 = vmatprep.subr.bf16.mxu0 0
      %589 = vmatpush1.bf16.msra.mxu0 0
      %590 = vmatprep.subr.bf16.mxu0 0
      %591 = vmatpush1.bf16.msra.mxu0 0
      %592 = vmatprep.subr.bf16.mxu0 0
      %593 = vmatpush1.bf16.msra.mxu0 0
      %594 = vmatprep.subr.bf16.mxu0 0
      %595 = vmatpush1.bf16.msra.mxu0 0
      %596 = vmatprep.subr.bf16.mxu0 0
      %597 = vmatpush1.bf16.msra.mxu0 0
      %598 = vmatprep.subr.bf16.mxu0 0
      %599 = vmatpush1.bf16.msra.mxu0 0
      %600 = vmatprep.subr.bf16.mxu0 0
      %601 = vmatpush1.bf16.msra.mxu0 0
      %602 = vmatprep.subr.bf16.mxu0 0
      %603 = vmatpush1.bf16.msra.mxu0 0
      %604 = vmatprep.subr.bf16.mxu0 0
      %605 = vmatpush1.bf16.msra.mxu0 0
      %606 = vmatprep.subr.bf16.mxu0 0
      %607 = vmatpush1.bf16.msra.mxu0 0
      %608 = vmatprep.subr.bf16.mxu0 0
      %609 = vmatpush1.bf16.msra.mxu0 0
      %610 = vmatprep.subr.bf16.mxu0 0
      %611 = vmatpush1.bf16.msra.mxu0 0
      %612 = vmatprep.mubr.bf16.mxu0 0
      %613 = vmatmul.mubr.bf16.gmra.mrb[0].mxu0 %v578
      %v614 = vpop.f32.mrb[0].mxu0
      %v615 = vadd.f32 %v562, %v614
      %v616 = vpop.f32.mrb[0].mxu0
      %v617 = vpop.f32.mrb[0].mxu0
      %v618 = vadd.f32 %v562, %v617
      %v619 = vpop.f32.mrb[0].mxu0
      %620 = vdwg.mxu0
      %v621 = vmax.f32 %v615, 0.0
      %v622 = vmax.f32 %v618, 0.0
      %v624 = vsel %vm576, %v552, 0
      %626 = vmatprep.subr.bf16.mxu0 0
      %627 = vmatpush1.bf16.msra.mxu0 %v572
      %628 = vmatprep.subr.bf16.mxu0 0
      %629 = vmatpush1.bf16.msra.mxu0 %v573
      %630 = vmatprep.subr.bf16.mxu0 0
      %631 = vmatpush1.bf16.msra.mxu0 0
      %632 = vmatprep.subr.bf16.mxu0 0
      %633 = vmatpush1.bf16.msra.mxu0 0
      %634 = vmatprep.subr.bf16.mxu0 0
      %635 = vmatpush1.bf16.msra.mxu0 0
      %636 = vmatprep.subr.bf16.mxu0 0
      %637 = vmatpush1.bf16.msra.mxu0 0
      %638 = vmatprep.subr.bf16.mxu0 0
      %639 = vmatpush1.bf16.msra.mxu0 0
      %640 = vmatprep.subr.bf16.mxu0 0
      %641 = vmatpush1.bf16.msra.mxu0 0
      %642 = vmatprep.subr.bf16.mxu0 0
      %643 = vmatpush1.bf16.msra.mxu0 0
      %644 = vmatprep.subr.bf16.mxu0 0
      %645 = vmatpush1.bf16.msra.mxu0 0
      %646 = vmatprep.subr.bf16.mxu0 0
      %647 = vmatpush1.bf16.msra.mxu0 0
      %648 = vmatprep.subr.bf16.mxu0 0
      %649 = vmatpush1.bf16.msra.mxu0 0
      %650 = vmatprep.subr.bf16.mxu0 0
      %651 = vmatpush1.bf16.msra.mxu0 0
      %652 = vmatprep.subr.bf16.mxu0 0
      %653 = vmatpush1.bf16.msra.mxu0 0
      %654 = vmatprep.subr.bf16.mxu0 0
      %655 = vmatpush1.bf16.msra.mxu0 0
      %656 = vmatprep.subr.bf16.mxu0 0
      %657 = vmatpush1.bf16.msra.mxu0 0
      %658 = vmatprep.mubr.bf16.mxu0 0
      %659 = vmatmul.mubr.bf16.gmra.mrb[0].mxu0 %v624
      %v660 = vpop.f32.mrb[0].mxu0
      %v661 = vadd.f32 %v562, %v660
      %v662 = vpop.f32.mrb[0].mxu0
      %v663 = vpop.f32.mrb[0].mxu0
      %v664 = vadd.f32 %v562, %v663
      %v665 = vpop.f32.mrb[0].mxu0
      %666 = vdwg.mxu0
      %v667 = vmax.f32 %v661, 0.0
      %v668 = vmax.f32 %v664, 0.0
      %s669 = scalar_select %p545, 1, 0
      %v670 = vstv %s669
      %vm671 = vcmp.eq.s32.totalorder %v670, 1
      %v672 = vsel %vm671, 0.0, %v667
      %v673 = vpack.c.bf16 %v672, %v672
      %s674 = scalar_select %p546, 1, 0
      %v675 = vstv %s674
      %vm676 = vcmp.eq.s32.totalorder %v675, 1
      %v677 = vsel %vm676, 0.0, %v668
      %v678 = vpack.c.bf16 %v677, %v677
      %v679 = vpack.c.bf16 %v622, %v621
      %v681 = vrot.slane %v679, 4
      %v683 = vrot.slane %v678, 4
      %vm684 = vcmask 1043456
      %v687 = vsel %vm684, %v673, %v681
      %v689 = vsel %vm684, %v681, %v683
      %vm692 = vcmask 1043456
      %v693 = vrot.slane %v687, 4
      %v694 = vrot.slane %v689, 4
      %v695 = vsel %vm692, %v693, %v694
      %696 = vrot.lane.b32.xlu0 %v695, 8
      %v697 = vpop.permute.xlu0 %696
      %698 = vrot.lane.b32.xlu0 %v689, 16
      %v699 = vpop.permute.xlu0 %698
      %vm700 = vcmask 64512
      %v702 = vsel %vm700, %v687, %v697
      %vm703 = vcmask 130048
      %v705 = vsel %vm703, %v702, %v699
      %v706 = vld [vmem:[%s7] sm:$0xf]
      %v707 = vld [vmem:[%s7 + $0x4] sm:$0xf]
      %v708 = vld [vmem:[%s7 + $0x8] sm:$0xf]
      %v712 = vunpack.c.l.b16 %v706
      %v713 = vunpack.c.l.b16 %v707
      %v714 = vunpack.c.l.b16 %v708
      %v715 = vpack.c.b16 %v713, %v712
      %v716 = vpack.c.b16 %v714, %v714
      %vm718 = vcmask 195584
      %v719 = vsel %vm718, %v705, 0
      %v722 = vsel %vm684, %v716, 0
      %724 = vmatprep.subr.bf16.mxu0 0
      %725 = vmatpush1.bf16.msra.mxu0 %v715
      %726 = vmatprep.subr.bf16.mxu0 0
      %727 = vmatpush1.bf16.msra.mxu0 %v722
      %728 = vmatprep.subr.bf16.mxu0 0
      %729 = vmatpush1.bf16.msra.mxu0 0
      %730 = vmatprep.subr.bf16.mxu0 0
      %731 = vmatpush1.bf16.msra.mxu0 0
      %732 = vmatprep.subr.bf16.mxu0 0
      %733 = vmatpush1.bf16.msra.mxu0 0
      %734 = vmatprep.subr.bf16.mxu0 0
      %735 = vmatpush1.bf16.msra.mxu0 0
      %736 = vmatprep.subr.bf16.mxu0 0
      %737 = vmatpush1.bf16.msra.mxu0 0
      %738 = vmatprep.subr.bf16.mxu0 0
      %739 = vmatpush1.bf16.msra.mxu0 0
      %740 = vmatprep.subr.bf16.mxu0 0
      %741 = vmatpush1.bf16.msra.mxu0 0
      %742 = vmatprep.subr.bf16.mxu0 0
      %743 = vmatpush1.bf16.msra.mxu0 0
      %744 = vmatprep.subr.bf16.mxu0 0
      %745 = vmatpush1.bf16.msra.mxu0 0
      %746 = vmatprep.subr.bf16.mxu0 0
      %747 = vmatpush1.bf16.msra.mxu0 0
      %748 = vmatprep.subr.bf16.mxu0 0
      %749 = vmatpush1.bf16.msra.mxu0 0
      %750 = vmatprep.subr.bf16.mxu0 0
      %751 = vmatpush1.bf16.msra.mxu0 0
      %752 = vmatprep.subr.bf16.mxu0 0
      %753 = vmatpush1.bf16.msra.mxu0 0
      %754 = vmatprep.subr.bf16.mxu0 0
      %755 = vmatpush1.bf16.msra.mxu0 0
      %756 = vmatprep.mubr.bf16.mxu0 0
      %757 = vmatmul.mubr.bf16.gmra.mrb[0].mxu0 %v719
      %v758 = vpop.f32.mrb[0].mxu0
      %v759 = vadd.f32 0.0, %v758
      %v760 = vpop.f32.mrb[0].mxu0
      %v761 = vpop.f32.mrb[0].mxu0
      %v762 = vadd.f32 0.0, %v761
      %v763 = vpop.f32.mrb[0].mxu0
      %764 = vdwg.mxu0
      %v765 = vrot.slane %v759, 7
      %v766 = vrot.slane %v762, 7
      %v767 = vlaneseq
      %v768 = vshrl.u32 %v767, 7
      %vm769 = vcmp.lt.s32.totalorder %v768, 1
      %v770 = vsel %vm769, %v765, %v766
      %v771 = vsel %vm769, %v766, %v765
      %v772 = vld [vmem:[%s3] sm:$0xff]
      %v773 = vld [vmem:[%s3 + $0x8] sm:$0xff]
      %775 = vset.pattern.permute.xlu0 0
      %776 = vperm.xlu0 %775, %v772
      %v777 = vpop.permute.xlu0 %776
      %780 = vset.pattern.permute.xlu0 0
      %781 = vperm.xlu0 %780, %v773
      %v782 = vpop.permute.xlu0 %781
      %v784 = vmul.f32 %v771, %v777
      %v785 = vmul.f32 %v770, %v782
      %788 = vrot.lane.b32.xlu0 %v759, 112
      %v789 = vpop.permute.xlu0 %788
      %790 = vrot.lane.b32.xlu0 %v762, 112
      %v791 = vpop.permute.xlu0 %790
      %v794 = vrot.slane %v789, 1
      %v795 = vrot.slane %v791, 1
      %vm796 = vcmp.lt.s32.totalorder %v768, 7
      %v797 = vsel %vm796, %v794, %v795
      %v798 = vsel %vm796, %v795, %v794
      %v799 = vld [vmem:[%s4] sm:$0xff]
      %v800 = vld [vmem:[%s4 + $0x8] sm:$0xff]
      %802 = vset.pattern.permute.xlu0 0
      %803 = vperm.xlu0 %802, %v799
      %v804 = vpop.permute.xlu0 %803
      %807 = vset.pattern.permute.xlu0 0
      %808 = vperm.xlu0 %807, %v800
      %v809 = vpop.permute.xlu0 %808
      %v811 = vmul.f32 %v797, %v804
      %v812 = vmul.f32 %v798, %v809
      %815 = vrot.lane.b32.xlu0 %v784, 8
      %v816 = vpop.permute.xlu0 %815
      %817 = vrot.lane.b32.xlu0 %v785, 8
      %v818 = vpop.permute.xlu0 %817
      %v821 = vadd.f32 %v759, %v816
      %v822 = vadd.f32 %v762, %v818
      %825 = vrot.lane.b32.xlu0 %v811, 8
      %v826 = vpop.permute.xlu0 %825
      %827 = vrot.lane.b32.xlu0 %v812, 8
      %v828 = vpop.permute.xlu0 %827
      %v831 = vadd.f32 %v821, %v826
      %v832 = vadd.f32 %v822, %v828
      %v833 = vld [vmem:[%s8] sm:$0x1]
      %v835 = vlaneseq
      %v836 = vshrl.u32 %v835, 7
      %v837 = vsub.s32 0, %v836
      %v838 = vrot.slane %v833, %v837
      %839 = vrot.lane.b32.xlu0 %v838, 8
      %v840 = vpop.permute.xlu0 %839
      %v842 = vadd.f32 %v831, %v840
      %v843 = vadd.f32 %v832, %v840
      %v844 = vmax.f32 %v842, 0.0
      %v845 = vmax.f32 %v843, 0.0
      %v846 = vpack.c.bf16 %v845, %v844
      %v847 = vld [vmem:[%s9] sm:$0xf]
      %v848 = vld [vmem:[%s10] sm:$0x1]
      %v850 = vlaneseq
      %v851 = vshrl.u32 %v850, 7
      %v852 = vsub.s32 0, %v851
      %v853 = vrot.slane %v848, %v852
      %856 = vrot.lane.b32.xlu0 %v846, 120
      %v857 = vpop.permute.xlu0 %856
      %v859 = vsel %vm700, %v857, 0
      %v862 = vsel %vm684, %v847, 0
      %864 = vmatprep.subr.bf16.mxu0 0
      %865 = vmatpush1.bf16.msra.mxu0 %v862
      %866 = vmatprep.subr.bf16.mxu0 0
      %867 = vmatpush1.bf16.msra.mxu0 0
      %868 = vmatprep.subr.bf16.mxu0 0
      %869 = vmatpush1.bf16.msra.mxu0 0
      %870 = vmatprep.subr.bf16.mxu0 0
      %871 = vmatpush1.bf16.msra.mxu0 0
      %872 = vmatprep.subr.bf16.mxu0 0
      %873 = vmatpush1.bf16.msra.mxu0 0
      %874 = vmatprep.subr.bf16.mxu0 0
      %875 = vmatpush1.bf16.msra.mxu0 0
      %876 = vmatprep.subr.bf16.mxu0 0
      %877 = vmatpush1.bf16.msra.mxu0 0
      %878 = vmatprep.subr.bf16.mxu0 0
      %879 = vmatpush1.bf16.msra.mxu0 0
      %880 = vmatprep.subr.bf16.mxu0 0
      %881 = vmatpush1.bf16.msra.mxu0 0
      %882 = vmatprep.subr.bf16.mxu0 0
      %883 = vmatpush1.bf16.msra.mxu0 0
      %884 = vmatprep.subr.bf16.mxu0 0
      %885 = vmatpush1.bf16.msra.mxu0 0
      %886 = vmatprep.subr.bf16.mxu0 0
      %887 = vmatpush1.bf16.msra.mxu0 0
      %888 = vmatprep.subr.bf16.mxu0 0
      %889 = vmatpush1.bf16.msra.mxu0 0
      %890 = vmatprep.subr.bf16.mxu0 0
      %891 = vmatpush1.bf16.msra.mxu0 0
      %892 = vmatprep.subr.bf16.mxu0 0
      %893 = vmatpush1.bf16.msra.mxu0 0
      %894 = vmatprep.subr.bf16.mxu0 0
      %895 = vmatpush1.bf16.msra.mxu0 0
      %896 = vmatprep.mubr.bf16.mxu0 0
      %897 = vmatmul.mubr.bf16.gmra.mrb[0].mxu0 %v859
      %v898 = vpop.f32.mrb[0].mxu0
      %v899 = vadd.f32 %v853, %v898
      %v900 = vpop.f32.mrb[0].mxu0
      %v901 = vpop.f32.mrb[0].mxu0
      %v902 = vadd.f32 %v853, %v901
      %v903 = vpop.f32.mrb[0].mxu0
      %904 = vdwg.mxu0
      %v905 = vadd.f32 %v899, %v547
      %v906 = vadd.f32 %v902, %v548
      %v907 = vmax.f32 %v905, 0.0
      %v908 = vmax.f32 %v906, 0.0
      %909 = vst.msk [vmem:[%s542] sm:$0xff] %vm576, %v907
      %910 = vst.msk [vmem:[%s542 + $0x8] sm:$0xff] %vm576, %v908
      %s911 = smul.u32 2, %s27
      %p912 = scmp.lt.s32.totalorder %s26, 1
      %s913 = scalar_select %p912, %s26, 1
      %p914 = scmp.lt.s32.totalorder %s911, 7
      %s915 = scalar_select %p914, %s911, 7
      %s916 = smul.addr %s913, 8
      %s917 = sadd.s32 %s915, %s916
      %s918 = smul.addr %s917, 8
      %s919 = scalar_lea.vmem %s11, %s918
      // Predicated region
      $region65: #{tpu_custom_call.1} parent=63 // pred_check
        %p920 = pneg %p322
      $region66: #{tpu_custom_call.1} parent=63 // pred_check_branch
        %922 = sbr.rel (%p920) target = $region68
      $region67: #{tpu_custom_call.1} parent=63 // pred_region
        %s923 = smul.u32 2, %s27
      $region68: #{tpu_custom_call.1} parent=63 // pred_fallthru
        _
    $region64: #{tpu_custom_call.1} parent=5 // pred_fallthru
      _
    %p924 = scmp.le.s32.totalorder 2, %s17
    // Predicated region
    $region69: #{tpu_custom_call.1} parent=5 // pred_check
      %p925 = pneg %p924
    $region70: #{tpu_custom_call.1} parent=5 // pred_check_branch
      %927 = sbr.rel (%p925) target = $region72
    $region71: #{tpu_custom_call.1} parent=5 // pred_region
      %s928 = ssub.s32 %s17, 2
      // Predicated region
      $region73: #{tpu_custom_call.1} parent=71 // pred_check
        %p929 = pneg %p328
      $region74: #{tpu_custom_call.1} parent=71 // pred_check_branch
        %931 = sbr.rel (%p929) target = $region76
      $region75: #{tpu_custom_call.1} parent=71 // pred_region
        %s932 = smul.u32 2, %s29
        %p933 = scmp.lt.s32.totalorder %s28, 1
        %s934 = scalar_select %p933, %s28, 1
        %p935 = scmp.lt.s32.totalorder %s932, 7
        %s936 = scalar_select %p935, %s932, 7
        %s937 = smul.addr %s934, 8
        %s938 = sadd.s32 %s936, %s937
        %s939 = smul.addr %s938, 8
        %s940 = scalar_lea.vmem %s11, %s939
      $region76: #{tpu_custom_call.1} parent=71 // pred_fallthru
        _
    $region72: #{tpu_custom_call.1} parent=5 // pred_fallthru
      _
  $region6: #{tpu_custom_call.1} parent=0 // loop_footer
    %s21 = sadd.s32 1, %s17
  $region7: #{tpu_custom_call.1} parent=0 // loop_footer_branch
    %16 = sbr.rel target = $region3
  $region8: #{tpu_custom_call.1} parent=0 // loop_exit
    _

</llo_original>
